<compile_context>
chip_gen: v7x
topology: tpu7x:2x2x1
jax: 0.10.0
libtpu: 0.0.40
codegen_flags: <defaults>
</compile_context>

<pallas_src>
import functools

import jax
import jax.numpy as jnp
from jax.experimental import pallas as pl
from jax.experimental.pallas import tpu as pltpu

LANE = 128      # f32 lane width
SUBLANE = 8     # f32 sublane count


def _cdiv(a, b):
    return -(-a // b)


def _round_up(x, m):
    return _cdiv(x, m) * m


def _resident_spec(shape):
    """VMEM-resident operand: constant index_map, single-buffered if supported."""
    index_map = lambda i: (0,) * len(shape)
    try:
        return pl.BlockSpec(shape, index_map, pipeline_mode=pl.Buffered(1))
    except (TypeError, AttributeError):
        # Older Pallas without pipeline_mode / Buffered: default double-buffer.
        return pl.BlockSpec(shape, index_map)


def _double_buffered_spec(shape):
    return pl.BlockSpec(shape, lambda i: (0,) * len(shape))


def _decoder_v2_kernel(x_ref, w1_ref, b1_ref, w2_ref, b2_ref, out_ref, *,
                       compute_dtype):
    # Operands arrive in the caller's dtype; casting to the MXU input dtype is
    # done here (rides a free VPU slot) instead of as a wrapper-side HBM pass.
    x = x_ref[...].astype(compute_dtype)
    w1 = w1_ref[...].astype(compute_dtype)
    # lin1 + ReLU: MXU matmul, f32 accumulate, f32 elementwise tail.
    h = jnp.dot(x, w1, preferred_element_type=jnp.float32)
    h = jnp.maximum(h + b1_ref[...].astype(jnp.float32), 0.0)   # b1 (1,H) broadcasts
    # lin2 + sigmoid
    logits = jnp.dot(h.astype(compute_dtype), w2_ref[...].astype(compute_dtype),
                     preferred_element_type=jnp.float32)
    logits = logits + b2_ref[...].astype(jnp.float32)
    out_ref[...] = jax.nn.sigmoid(logits).astype(out_ref.dtype)


@functools.partial(
    jax.jit,
    static_argnames=("block_b", "use_bf16", "out_dtype", "single_buffer_weights"))
def _decoder_v2_impl(x, w1, b1, w2, b2, *, block_b, use_bf16, out_dtype,
                     single_buffer_weights):
    B, latent_dim = x.shape
    h_dim = w1.shape[1]
    input_dim = w2.shape[1]
    compute_dtype = jnp.bfloat16 if use_bf16 else x.dtype

    b1 = jnp.reshape(b1, (1, h_dim))
    b2 = jnp.reshape(b2, (1, input_dim))

    # ---- K (latent) alignment: pad only to the sublane-packing multiple, never 128.
    k_align = 16 if use_bf16 else SUBLANE
    if latent_dim % k_align:
        k_pad = _round_up(latent_dim, k_align) - latent_dim
        x = jnp.pad(x, ((0, 0), (0, k_pad)))          # rare: only misaligned K
        w1 = jnp.pad(w1, ((0, k_pad), (0, 0)))
        latent_dim += k_pad

    # ---- output columns: lane-dense pad only when within ~15% of a 128 multiple.
    o_full = _round_up(input_dim, LANE)
    pad_cols = (input_dim % LANE != 0) and (o_full * 100 <= input_dim * 115)
    o_cols = o_full if pad_cols else input_dim
    if pad_cols:
        w2 = jnp.pad(w2, ((0, 0), (0, o_cols - input_dim)))
        b2 = jnp.pad(b2, ((0, 0), (0, o_cols - input_dim)))

    # ---- batch tiling: no batch padding; Pallas masks the ragged last tile. ----
    row_align = 16 if (use_bf16 and B >= 16) else SUBLANE
    n_tiles = _cdiv(B, block_b)
    if n_tiles == 1 and B >= 2 * row_align:
        n_tiles = 2                      # keep both v7x TensorCores fed
    tb = _round_up(_cdiv(B, n_tiles), row_align)
    grid_b = _cdiv(B, tb)

    resident = _resident_spec if single_buffer_weights else _double_buffered_spec

    # ---- generation-aware VMEM limit ----
    w_bufs = 1 if single_buffer_weights else 2
    out_isize = jnp.dtype(out_dtype).itemsize
    vmem_est = (
        2 * tb * latent_dim * x.dtype.itemsize               # x tiles (double-buffered)
        + 2 * tb * o_cols * out_isize                        # out tiles
        + w_bufs * (w1.size * w1.dtype.itemsize + w2.size * w2.dtype.itemsize
                    + b1.size * b1.dtype.itemsize + b2.size * b2.dtype.itemsize)
        + tb * h_dim * 4 + tb * o_cols * 4                   # f32 intermediates
    )
    try:
        vmem_cap = int(pltpu.get_tpu_info().vmem_capacity_bytes)
    except Exception:
        vmem_cap = 64 << 20
    vmem_ceiling = min((vmem_cap * 3) // 4, 100 << 20)       # v7x ~48 MiB, v5e/v6e ~96 MiB
    vmem_limit = int(min(max(2 * vmem_est, 8 << 20), vmem_ceiling))

    # Advisory cost estimate for the XLA scheduler.
    flops = 2 * B * (latent_dim * h_dim + h_dim * o_cols)
    bytes_accessed = (
        x.size * x.dtype.itemsize
        + w1.size * w1.dtype.itemsize + w2.size * w2.dtype.itemsize
        + b1.size * b1.dtype.itemsize + b2.size * b2.dtype.itemsize
        + B * o_cols * out_isize)

    kernel = functools.partial(_decoder_v2_kernel, compute_dtype=compute_dtype)

    out = pl.pallas_call(
        kernel,
        out_shape=jax.ShapeDtypeStruct((B, o_cols), out_dtype),
        grid_spec=pltpu.PrefetchScalarGridSpec(
            num_scalar_prefetch=0,
            grid=(grid_b,),
            in_specs=[
                pl.BlockSpec((tb, latent_dim), lambda i: (i, 0)),   # x tile (pipelined)
                resident((latent_dim, h_dim)),                      # W1 resident
                resident((1, h_dim)),                               # b1 resident
                resident((h_dim, o_cols)),                          # W2 resident
                resident((1, o_cols)),                              # b2 resident
            ],
            out_specs=pl.BlockSpec((tb, o_cols), lambda i: (i, 0)),
        ),
        compiler_params=pltpu.CompilerParams(
            dimension_semantics=("parallel",),     # v7x: 2 TCs split batch tiles
            vmem_limit_bytes=vmem_limit,
        ),
        cost_estimate=pl.CostEstimate(
            flops=flops, transcendentals=B * o_cols, bytes_accessed=bytes_accessed),
    )(x, w1, b1, w2, b2)

    if pad_cols:
        out = out[:, :input_dim]
    return out


def decoder_v2_forward(x, w1, b1, w2, b2, *, block_b=512, use_bf16=True,
                       out_dtype=None):
    """Fused Decoder_v2 forward.

    x : (B, latent_dim)
    w1: (latent_dim, h_dim)  b1: (h_dim,)
    w2: (h_dim, input_dim)   b2: (input_dim,)
    Weights are stored (in, out) so the kernel computes x @ W (matches
    PyTorch's x @ W.T with (out, in) storage).
    use_bf16: bf16 MXU inputs with f32 accumulation (widens error vs f32 ref).
    """
    out_dtype = jnp.dtype(out_dtype) if out_dtype is not None else jnp.dtype(x.dtype)
    kwargs = dict(block_b=int(block_b), use_bf16=bool(use_bf16), out_dtype=out_dtype)
    try:
        return _decoder_v2_impl(x, w1, b1, w2, b2,
                                single_buffer_weights=True, **kwargs)
    except Exception:
        # pipeline_mode=pl.Buffered(1) is a newer Pallas feature; retry with
        # default double-buffered resident weights. Any unrelated failure will
        # re-raise from this second attempt.
        return _decoder_v2_impl(x, w1, b1, w2, b2,
                                single_buffer_weights=False, **kwargs)


def init_decoder_v2_params(key, latent_dim, h_dim, input_dim, dtype=jnp.float32):
    """Deterministic init mimicking nn.Linear's uniform(-1/sqrt(fan_in), ...)."""
    k1, k2, k3, k4 = jax.random.split(key, 4)
    bound1 = 1.0 / jnp.sqrt(latent_dim)
    bound2 = 1.0 / jnp.sqrt(h_dim)
    # Stored as (in_features, out_features) for the x @ W convention.
    w1 = jax.random.uniform(k1, (latent_dim, h_dim), dtype, -bound1, bound1)
    b1 = jax.random.uniform(k2, (h_dim,), dtype, -bound1, bound1)
    w2 = jax.random.uniform(k3, (h_dim, input_dim), dtype, -bound2, bound2)
    b2 = jax.random.uniform(k4, (input_dim,), dtype, -bound2, bound2)
    return w1, b1, w2, b2


def decoder_v2_ref(x, w1, b1, w2, b2):
    """Plain-JAX reference matching the PyTorch forward."""
    h = jax.nn.relu(x @ w1 + jnp.reshape(b1, (1, -1)))
    return jax.nn.sigmoid(h @ w2 + jnp.reshape(b2, (1, -1)))


if __name__ == "__main__":
    key = jax.random.PRNGKey(0)

    # 1) Small batch, exact f32 path, single tile: tight tolerance.
    latent_dim, h_dim, input_dim = 16, 32, 64
    kx, kp = jax.random.split(key)
    w1, b1, w2, b2 = init_decoder_v2_params(kp, latent_dim, h_dim, input_dim)
    x_small = jax.random.normal(kx, (8, latent_dim), jnp.float32)
    out_small = jax.block_until_ready(
        decoder_v2_forward(x_small, w1, b1, w2, b2, use_bf16=False))
    ref_small = decoder_v2_ref(x_small, w1, b1, w2, b2)
    assert out_small.shape == (8, input_dim)
    assert jnp.allclose(out_small, ref_small, atol=1e-5, rtol=1e-5), \
        "f32 path mismatch vs reference"

    # 2) Ragged multi-tile batch exercising the bf16 MXU fast path + masked last tile.
    x_big = jax.random.normal(kx, (72, latent_dim), jnp.float32)
    out_big = jax.block_until_ready(
        decoder_v2_forward(x_big, w1, b1, w2, b2, use_bf16=True))
    ref_big = decoder_v2_ref(x_big, w1, b1, w2, b2)
    assert out_big.shape == (72, input_dim)
    assert jnp.allclose(out_big, ref_big, atol=2e-2, rtol=0.0), \
        "bf16 path mismatch vs reference"

    # 3) Misaligned latent (K pad), near-multiple output (lane-pad + slice),
    #    ragged batch — exact f32 path.
    latent3, h3, in3 = 12, 24, 120
    kx3, kp3 = jax.random.split(kp)
    w1c, b1c, w2c, b2c = init_decoder_v2_params(kp3, latent3, h3, in3)
    x_c = jax.random.normal(kx3, (20, latent3), jnp.float32)
    out_c = jax.block_until_ready(
        decoder_v2_forward(x_c, w1c, b1c, w2c, b2c, use_bf16=False))
    ref_c = decoder_v2_ref(x_c, w1c, b1c, w2c, b2c)
    assert out_c.shape == (20, in3)
    assert jnp.allclose(out_c, ref_c, atol=1e-5, rtol=1e-5), \
        "padded-path mismatch vs reference"

    print("KERNEL_OK")
</pallas_src>

<mosaic_0001>
module attributes {stable_mosaic.version = 11 : i64} {
  func.func @_decoder_v2_kernel(%arg0: i32, %arg1: memref<8x16xf32, #tpu.memory_space<vmem>>, %arg2: memref<16x32xf32, #tpu.memory_space<vmem>>, %arg3: memref<1x32xf32, #tpu.memory_space<vmem>>, %arg4: memref<32x64xf32, #tpu.memory_space<vmem>>, %arg5: memref<1x64xf32, #tpu.memory_space<vmem>>, %arg6: memref<8x64xf32, #tpu.memory_space<vmem>>) attributes {dimension_semantics = [#tpu.dimension_semantics<parallel>], iteration_bounds = array<i64: 1>, scalar_prefetch = 0 : i64, scratch_operands = 0 : i64, tpu.core_type = #tpu.core_type<tc>, window_params = [{transform_indices = @transform_0, window_bounds = array<i64: 8, 16>}, {pipeline_mode = #tpu.pipeline_mode<synchronous>, transform_indices = @transform_1, window_bounds = array<i64: 16, 32>}, {pipeline_mode = #tpu.pipeline_mode<synchronous>, transform_indices = @transform_2, window_bounds = array<i64: 1, 32>}, {pipeline_mode = #tpu.pipeline_mode<synchronous>, transform_indices = @transform_3, window_bounds = array<i64: 32, 64>}, {pipeline_mode = #tpu.pipeline_mode<synchronous>, transform_indices = @transform_4, window_bounds = array<i64: 1, 64>}, {transform_indices = @transform_5, window_bounds = array<i64: 8, 64>}]} {
    %c0 = arith.constant 0 : index
    %c0_0 = arith.constant 0 : index
    %0 = vector.load %arg1[%c0, %c0_0] : memref<8x16xf32, #tpu.memory_space<vmem>>, vector<8x16xf32>
    %c0_1 = arith.constant 0 : index
    %c0_2 = arith.constant 0 : index
    %1 = vector.load %arg2[%c0_1, %c0_2] : memref<16x32xf32, #tpu.memory_space<vmem>>, vector<16x32xf32>
    %cst = arith.constant dense<0.000000e+00> : vector<8x32xf32>
    %2 = tpu.matmul %0, %1, %cst {dimension_numbers = #tpu.dot_dimension_numbers<[1], [0], [0], [1], [0, 0, 1, 1], [], []>} : vector<8x16xf32>, vector<16x32xf32>, vector<8x32xf32> -> vector<8x32xf32>
    %c0_3 = arith.constant 0 : index
    %c0_4 = arith.constant 0 : index
    %3 = vector.load %arg3[%c0_3, %c0_4] : memref<1x32xf32, #tpu.memory_space<vmem>>, vector<1x32xf32>
    %4 = vector.broadcast %3 : vector<1x32xf32> to vector<8x32xf32>
    %5 = arith.addf %2, %4 : vector<8x32xf32>
    %cst_5 = arith.constant 0.000000e+00 : f32
    %6 = vector.broadcast %cst_5 : f32 to vector<8x32xf32>
    %7 = arith.maximumf %5, %6 : vector<8x32xf32>
    %c0_6 = arith.constant 0 : index
    %c0_7 = arith.constant 0 : index
    %8 = vector.load %arg4[%c0_6, %c0_7] : memref<32x64xf32, #tpu.memory_space<vmem>>, vector<32x64xf32>
    %cst_8 = arith.constant dense<0.000000e+00> : vector<8x64xf32>
    %9 = tpu.matmul %7, %8, %cst_8 {dimension_numbers = #tpu.dot_dimension_numbers<[1], [0], [0], [1], [0, 0, 1, 1], [], []>} : vector<8x32xf32>, vector<32x64xf32>, vector<8x64xf32> -> vector<8x64xf32>
    %c0_9 = arith.constant 0 : index
    %c0_10 = arith.constant 0 : index
    %10 = vector.load %arg5[%c0_9, %c0_10] : memref<1x64xf32, #tpu.memory_space<vmem>>, vector<1x64xf32>
    %11 = vector.broadcast %10 : vector<1x64xf32> to vector<8x64xf32>
    %12 = arith.addf %9, %11 : vector<8x64xf32>
    %13 = arith.negf %12 : vector<8x64xf32>
    %14 = math.exp %13 : vector<8x64xf32>
    %cst_11 = arith.constant 1.000000e+00 : f32
    %15 = vector.broadcast %cst_11 : f32 to vector<8x64xf32>
    %16 = arith.addf %15, %14 : vector<8x64xf32>
    %17 = arith.divf %15, %16 : vector<8x64xf32>
    %c0_12 = arith.constant 0 : index
    %c0_13 = arith.constant 0 : index
    %18 = vector.load %arg6[%c0_12, %c0_13] : memref<8x64xf32, #tpu.memory_space<vmem>>, vector<8x64xf32>
    tpu.vector_store %arg6[%c0_12, %c0_13], %17 {strides = array<i32>} : memref<8x64xf32, #tpu.memory_space<vmem>>, vector<8x64xf32>,
    return
  }
  func.func @transform_0(%arg0: i32) -> (i32, i32) {
    %c0_i32 = arith.constant 0 : i32
    %c0_i32_0 = arith.constant 0 : i32
    return %arg0, %c0_i32 : i32, i32
  }
  func.func @transform_1(%arg0: i32) -> (i32, i32) {
    %c0_i32 = arith.constant 0 : i32
    %c0_i32_0 = arith.constant 0 : i32
    %c0_i32_1 = arith.constant 0 : i32
    return %c0_i32, %c0_i32_0 : i32, i32
  }
  func.func @transform_2(%arg0: i32) -> (i32, i32) {
    %c0_i32 = arith.constant 0 : i32
    %c0_i32_0 = arith.constant 0 : i32
    %c0_i32_1 = arith.constant 0 : i32
    return %c0_i32, %c0_i32_0 : i32, i32
  }
  func.func @transform_3(%arg0: i32) -> (i32, i32) {
    %c0_i32 = arith.constant 0 : i32
    %c0_i32_0 = arith.constant 0 : i32
    %c0_i32_1 = arith.constant 0 : i32
    return %c0_i32, %c0_i32_0 : i32, i32
  }
  func.func @transform_4(%arg0: i32) -> (i32, i32) {
    %c0_i32 = arith.constant 0 : i32
    %c0_i32_0 = arith.constant 0 : i32
    %c0_i32_1 = arith.constant 0 : i32
    return %c0_i32, %c0_i32_0 : i32, i32
  }
  func.func @transform_5(%arg0: i32) -> (i32, i32) {
    %c0_i32 = arith.constant 0 : i32
    %c0_i32_0 = arith.constant 0 : i32
    return %arg0, %c0_i32 : i32, i32
  }
}

module attributes {stable_mosaic.version = 11 : i64} {
  func.func @_decoder_v2_kernel(%arg0: i32, %arg1: memref<8x16xf32, #tpu.memory_space<vmem>>, %arg2: memref<16x32xf32, #tpu.memory_space<vmem>>, %arg3: memref<1x32xf32, #tpu.memory_space<vmem>>, %arg4: memref<32x64xf32, #tpu.memory_space<vmem>>, %arg5: memref<1x64xf32, #tpu.memory_space<vmem>>, %arg6: memref<8x64xf32, #tpu.memory_space<vmem>>) attributes {dimension_semantics = [#tpu.dimension_semantics<parallel>], iteration_bounds = array<i64: 1>, scalar_prefetch = 0 : i64, scratch_operands = 0 : i64, tpu.core_type = #tpu.core_type<tc>, window_params = [{transform_indices = @transform_0, window_bounds = array<i64: 8, 16>}, {pipeline_mode = #tpu.pipeline_mode<synchronous>, transform_indices = @transform_1, window_bounds = array<i64: 16, 32>}, {pipeline_mode = #tpu.pipeline_mode<synchronous>, transform_indices = @transform_2, window_bounds = array<i64: 1, 32>}, {pipeline_mode = #tpu.pipeline_mode<synchronous>, transform_indices = @transform_3, window_bounds = array<i64: 32, 64>}, {pipeline_mode = #tpu.pipeline_mode<synchronous>, transform_indices = @transform_4, window_bounds = array<i64: 1, 64>}, {transform_indices = @transform_5, window_bounds = array<i64: 8, 64>}]} {
    %c0 = arith.constant 0 : index
    %c0_0 = arith.constant 0 : index
    %0 = vector.load %arg1[%c0, %c0_0] : memref<8x16xf32, #tpu.memory_space<vmem>>, vector<8x16xf32>
    %c0_1 = arith.constant 0 : index
    %c0_2 = arith.constant 0 : index
    %1 = vector.load %arg2[%c0_1, %c0_2] : memref<16x32xf32, #tpu.memory_space<vmem>>, vector<16x32xf32>
    %cst = arith.constant dense<0.000000e+00> : vector<8x32xf32>
    %2 = tpu.matmul %0, %1, %cst {dimension_numbers = #tpu.dot_dimension_numbers<[1], [0], [0], [1], [0, 0, 1, 1], [], []>} : vector<8x16xf32>, vector<16x32xf32>, vector<8x32xf32> -> vector<8x32xf32>
    %c0_3 = arith.constant 0 : index
    %c0_4 = arith.constant 0 : index
    %3 = vector.load %arg3[%c0_3, %c0_4] : memref<1x32xf32, #tpu.memory_space<vmem>>, vector<1x32xf32>
    %4 = vector.broadcast %3 : vector<1x32xf32> to vector<8x32xf32>
    %5 = arith.addf %2, %4 : vector<8x32xf32>
    %cst_5 = arith.constant 0.000000e+00 : f32
    %6 = vector.broadcast %cst_5 : f32 to vector<8x32xf32>
    %7 = arith.maximumf %5, %6 : vector<8x32xf32>
    %c0_6 = arith.constant 0 : index
    %c0_7 = arith.constant 0 : index
    %8 = vector.load %arg4[%c0_6, %c0_7] : memref<32x64xf32, #tpu.memory_space<vmem>>, vector<32x64xf32>
    %cst_8 = arith.constant dense<0.000000e+00> : vector<8x64xf32>
    %9 = tpu.matmul %7, %8, %cst_8 {dimension_numbers = #tpu.dot_dimension_numbers<[1], [0], [0], [1], [0, 0, 1, 1], [], []>} : vector<8x32xf32>, vector<32x64xf32>, vector<8x64xf32> -> vector<8x64xf32>
    %c0_9 = arith.constant 0 : index
    %c0_10 = arith.constant 0 : index
    %10 = vector.load %arg5[%c0_9, %c0_10] : memref<1x64xf32, #tpu.memory_space<vmem>>, vector<1x64xf32>
    %11 = vector.broadcast %10 : vector<1x64xf32> to vector<8x64xf32>
    %12 = arith.addf %9, %11 : vector<8x64xf32>
    %13 = arith.negf %12 : vector<8x64xf32>
    %14 = math.exp %13 : vector<8x64xf32>
    %cst_11 = arith.constant 1.000000e+00 : f32
    %15 = vector.broadcast %cst_11 : f32 to vector<8x64xf32>
    %16 = arith.addf %15, %14 : vector<8x64xf32>
    %17 = arith.divf %15, %16 : vector<8x64xf32>
    %c0_12 = arith.constant 0 : index
    %c0_13 = arith.constant 0 : index
    %18 = vector.load %arg6[%c0_12, %c0_13] : memref<8x64xf32, #tpu.memory_space<vmem>>, vector<8x64xf32>
    tpu.vector_store %arg6[%c0_12, %c0_13], %17 {strides = array<i32>} : memref<8x64xf32, #tpu.memory_space<vmem>>, vector<8x64xf32>,
    return
  }
  func.func @transform_0(%arg0: i32) -> (i32, i32) {
    %c0_i32 = arith.constant 0 : i32
    %c0_i32_0 = arith.constant 0 : i32
    return %arg0, %c0_i32 : i32, i32
  }
  func.func @transform_1(%arg0: i32) -> (i32, i32) {
    %c0_i32 = arith.constant 0 : i32
    %c0_i32_0 = arith.constant 0 : i32
    %c0_i32_1 = arith.constant 0 : i32
    return %c0_i32, %c0_i32_0 : i32, i32
  }
  func.func @transform_2(%arg0: i32) -> (i32, i32) {
    %c0_i32 = arith.constant 0 : i32
    %c0_i32_0 = arith.constant 0 : i32
    %c0_i32_1 = arith.constant 0 : i32
    return %c0_i32, %c0_i32_0 : i32, i32
  }
  func.func @transform_3(%arg0: i32) -> (i32, i32) {
    %c0_i32 = arith.constant 0 : i32
    %c0_i32_0 = arith.constant 0 : i32
    %c0_i32_1 = arith.constant 0 : i32
    return %c0_i32, %c0_i32_0 : i32, i32
  }
  func.func @transform_4(%arg0: i32) -> (i32, i32) {
    %c0_i32 = arith.constant 0 : i32
    %c0_i32_0 = arith.constant 0 : i32
    %c0_i32_1 = arith.constant 0 : i32
    return %c0_i32, %c0_i32_0 : i32, i32
  }
  func.func @transform_5(%arg0: i32) -> (i32, i32) {
    %c0_i32 = arith.constant 0 : i32
    %c0_i32_0 = arith.constant 0 : i32
    return %arg0, %c0_i32 : i32, i32
  }
}

</mosaic_0001>

<llo_original>
// kernel: _decoder_v2_impl.1
$region0: #{_decoder_v2_impl.1}
  #allocation0 [shape = 'u32[]', space=smem, size = 0x4, offset = 0x4, fixed_abs, tag = 'smem constant byte address 0x4 - core index']
  #allocation1 [shape = 'u32[144,128]{1,0:T(1,128)}', space=vmem, size = 0x12000, scoped, tag = 'internal scratch']
  %s0 = inlined_call_operand.hbm [shape: f32[8,16], index: 0, kind: input, shape index: {}]
  %s1 = inlined_call_operand.hbm [shape: f32[16,32], index: 1, kind: input, shape index: {}]
  %s2 = inlined_call_operand.vmem [shape: f32[1,32], index: 2, kind: input, shape index: {}]
  %s3 = inlined_call_operand.hbm [shape: f32[32,64], index: 3, kind: input, shape index: {}]
  %s4 = inlined_call_operand.vmem [shape: f32[1,64], index: 4, kind: input, shape index: {}]
  %s5 = inlined_call_operand.hbm [shape: f32[8,64], index: 5, kind: output, shape index: {}]
  %s6 = sld [smem:[#allocation0]]
  $region42: #{_decoder_v2_impl.1} parent=0
    _
  %s8 = ssub.s32 1, %s6
  %s9 = scalar_select 0, %s8, %s6
  $region1: #{_decoder_v2_impl.1} parent=0
    #allocation2 [shape = 'u8[4096]{0}', space=vmem, size = 0x1000, scoped, tag = 'input window, operand 0, single buffered']
    #allocation3 [shape = 's32[1]{0}', space=sflag, size = 0x4, scoped, tag = 'scoped memory for _decoder_v2_impl.1']
    #allocation4 [shape = 's32[1]{0}', space=sflag, size = 0x4, scoped, tag = 'scoped memory for _decoder_v2_impl.1']
    #allocation5 [shape = 'u8[8192]{0}', space=vmem, size = 0x2000, scoped, tag = 'input window, operand 1, single buffered']
    #allocation6 [shape = 's32[1]{0}', space=sflag, size = 0x4, scoped, tag = 'scoped memory for _decoder_v2_impl.1']
    #allocation7 [shape = 'u8[16384]{0}', space=vmem, size = 0x4000, scoped, tag = 'input window, operand 3, single buffered']
    #allocation8 [shape = 'u8[4096]{0}', space=vmem, size = 0x1000, scoped, tag = 'output window, operand 0, single buffered']
    %10 = vsyncpa [#allocation3], 0
    %11 = vsyncpa [#allocation6], 0
    %12 = vsyncpa [#allocation4], 0
    // Predicated region
    $region2: #{_decoder_v2_impl.1} parent=1 // pred_check
      _
    $region3: #{_decoder_v2_impl.1} parent=1 // pred_check_branch
      %14 = sbr.rel (0) target = $region5
    $region4: #{_decoder_v2_impl.1} parent=1 // pred_region
      %s16 = ssub.s32 128, 128
      %17 = vsyncadd [#allocation3], %s16
      %s19 = sshll.u32 [#allocation2], 4
      %s20 = int_to_ptr.vmem [resolvable:$true] %s19
      %22 = dma.hbm_to_vmem [thread:$0]  %s0, 128, %s20, [#allocation3]
    $region5: #{_decoder_v2_impl.1} parent=1 // pred_fallthru
      _
    // Predicated region
    $region6: #{_decoder_v2_impl.1} parent=1 // pred_check
      _
    $region7: #{_decoder_v2_impl.1} parent=1 // pred_check_branch
      %24 = sbr.rel (0) target = $region9
    $region8: #{_decoder_v2_impl.1} parent=1 // pred_region
      %s26 = ssub.s32 256, 256
      %27 = vsyncadd [#allocation6], %s26
      %s28 = sshll.u32 [#allocation5], 4
      %s29 = int_to_ptr.vmem [resolvable:$true] %s28
      %34 = dma.hbm_to_vmem [thread:$0]  %s1, 256, %s29, [#allocation6], 128, 128, 8
    $region9: #{_decoder_v2_impl.1} parent=1 // pred_fallthru
      _
    // Predicated region
    $region10: #{_decoder_v2_impl.1} parent=1 // pred_check
      _
    $region11: #{_decoder_v2_impl.1} parent=1 // pred_check_branch
      %36 = sbr.rel (0) target = $region13
    $region12: #{_decoder_v2_impl.1} parent=1 // pred_region
      _
    $region13: #{_decoder_v2_impl.1} parent=1 // pred_fallthru
      _
    // Predicated region
    $region14: #{_decoder_v2_impl.1} parent=1 // pred_check
      _
    $region15: #{_decoder_v2_impl.1} parent=1 // pred_check_branch
      %38 = sbr.rel (0) target = $region17
    $region16: #{_decoder_v2_impl.1} parent=1 // pred_region
      %s40 = ssub.s32 512, 512
      %41 = vsyncadd [#allocation6], %s40
      %s42 = sshll.u32 [#allocation7], 4
      %s43 = int_to_ptr.vmem [resolvable:$true] %s42
      %48 = dma.hbm_to_vmem [thread:$0]  %s3, 512, %s43, [#allocation6], 128, 128, 8
    $region17: #{_decoder_v2_impl.1} parent=1 // pred_fallthru
      _
    // Predicated region
    $region18: #{_decoder_v2_impl.1} parent=1 // pred_check
      _
    $region19: #{_decoder_v2_impl.1} parent=1 // pred_check_branch
      %50 = sbr.rel (0) target = $region21
    $region20: #{_decoder_v2_impl.1} parent=1 // pred_region
      _
    $region21: #{_decoder_v2_impl.1} parent=1 // pred_fallthru
      _
    // Predicated region
    $region22: #{_decoder_v2_impl.1} parent=1 // pred_check
      _
    $region23: #{_decoder_v2_impl.1} parent=1 // pred_check_branch
      %52 = sbr.rel (0) target = $region25
    $region24: #{_decoder_v2_impl.1} parent=1 // pred_region
      %53 = dma.done [#allocation3], 128
    $region25: #{_decoder_v2_impl.1} parent=1 // pred_fallthru
      _
    // Predicated region
    $region26: #{_decoder_v2_impl.1} parent=1 // pred_check
      _
    $region27: #{_decoder_v2_impl.1} parent=1 // pred_check_branch
      %55 = sbr.rel (0) target = $region29
    $region28: #{_decoder_v2_impl.1} parent=1 // pred_region
      %56 = dma.done [#allocation6], 256
    $region29: #{_decoder_v2_impl.1} parent=1 // pred_fallthru
      _
    // Predicated region
    $region30: #{_decoder_v2_impl.1} parent=1 // pred_check
      _
    $region31: #{_decoder_v2_impl.1} parent=1 // pred_check_branch
      %58 = sbr.rel (0) target = $region33
    $region32: #{_decoder_v2_impl.1} parent=1 // pred_region
      %59 = dma.done [#allocation6], 512
    $region33: #{_decoder_v2_impl.1} parent=1 // pred_fallthru
      _
    %v60 = vld [vmem:[#allocation2] sm:$0xff]
    %v61 = vld [vmem:[#allocation5] sm:$0xff]
    %v62 = vld [vmem:[#allocation5 + $0x8] sm:$0xff]
    %v63 = vld [vmem:[%s2] sm:$0x1]
    %v65 = vlaneseq
    %v66 = vshrl.u32 %v65, 7
    %v67 = vsub.s32 0, %v66
    %v68 = vrot.slane %v63, %v67
    %vm70 = vcmask 130048
    %v72 = vsel %vm70, %v60, 0
    %74 = vmatprep.subr.mxu0 0.0
    %75 = vmatpush1.msra.mxu0 %v61
    %76 = vmatprep.subr.mxu0 0.0
    %77 = vmatpush1.msra.mxu0 %v62
    %78 = vmatprep.subr.mxu0 0.0
    %79 = vmatpush1.msra.mxu0 0.0
    %80 = vmatprep.subr.mxu0 0.0
    %81 = vmatpush1.msra.mxu0 0.0
    %82 = vmatprep.subr.mxu0 0.0
    %83 = vmatpush1.msra.mxu0 0.0
    %84 = vmatprep.subr.mxu0 0.0
    %85 = vmatpush1.msra.mxu0 0.0
    %86 = vmatprep.subr.mxu0 0.0
    %87 = vmatpush1.msra.mxu0 0.0
    %88 = vmatprep.subr.mxu0 0.0
    %89 = vmatpush1.msra.mxu0 0.0
    %90 = vmatprep.subr.mxu0 0.0
    %91 = vmatpush1.msra.mxu0 0.0
    %92 = vmatprep.subr.mxu0 0.0
    %93 = vmatpush1.msra.mxu0 0.0
    %94 = vmatprep.subr.mxu0 0.0
    %95 = vmatpush1.msra.mxu0 0.0
    %96 = vmatprep.subr.mxu0 0.0
    %97 = vmatpush1.msra.mxu0 0.0
    %98 = vmatprep.subr.mxu0 0.0
    %99 = vmatpush1.msra.mxu0 0.0
    %100 = vmatprep.subr.mxu0 0.0
    %101 = vmatpush1.msra.mxu0 0.0
    %102 = vmatprep.subr.mxu0 0.0
    %103 = vmatpush1.msra.mxu0 0.0
    %104 = vmatprep.subr.mxu0 0.0
    %105 = vmatpush1.msra.mxu0 0.0
    %106 = vmatprep.subr.mxu0 0.0
    %107 = vmatpush1.msra.mxu0 0.0
    %108 = vmatprep.subr.mxu0 0.0
    %109 = vmatpush1.msra.mxu0 0.0
    %110 = vmatprep.subr.mxu0 0.0
    %111 = vmatpush1.msra.mxu0 0.0
    %112 = vmatprep.subr.mxu0 0.0
    %113 = vmatpush1.msra.mxu0 0.0
    %114 = vmatprep.subr.mxu0 0.0
    %115 = vmatpush1.msra.mxu0 0.0
    %116 = vmatprep.subr.mxu0 0.0
    %117 = vmatpush1.msra.mxu0 0.0
    %118 = vmatprep.subr.mxu0 0.0
    %119 = vmatpush1.msra.mxu0 0.0
    %120 = vmatprep.subr.mxu0 0.0
    %121 = vmatpush1.msra.mxu0 0.0
    %122 = vmatprep.subr.mxu0 0.0
    %123 = vmatpush1.msra.mxu0 0.0
    %124 = vmatprep.subr.mxu0 0.0
    %125 = vmatpush1.msra.mxu0 0.0
    %126 = vmatprep.subr.mxu0 0.0
    %127 = vmatpush1.msra.mxu0 0.0
    %128 = vmatprep.subr.mxu0 0.0
    %129 = vmatpush1.msra.mxu0 0.0
    %130 = vmatprep.subr.mxu0 0.0
    %131 = vmatpush1.msra.mxu0 0.0
    %132 = vmatprep.subr.mxu0 0.0
    %133 = vmatpush1.msra.mxu0 0.0
    %134 = vmatprep.subr.mxu0 0.0
    %135 = vmatpush1.msra.mxu0 0.0
    %136 = vmatprep.subr.mxu0 0.0
    %137 = vmatpush1.msra.mxu0 0.0
    %138 = vmatprep.mubr.f32.mxu0 0.0
    %139 = vmatmul.mubr.f32.gmra.mrb[0].mxu0 %v72
    %v140 = vpop.f32.mrb[0].mxu0
    %v141 = vadd.f32 %v68, %v140
    %v142 = vpop.f32.mrb[0].mxu0
    %143 = vdwg.mxu0
    %v144 = vmax.f32 %v141, 0.0
    %v145 = vld [vmem:[#allocation7] sm:$0xff]
    %v146 = vld [vmem:[#allocation7 + $0x8] sm:$0xff]
    %v147 = vld [vmem:[#allocation7 + $0x10] sm:$0xff]
    %v148 = vld [vmem:[#allocation7 + $0x18] sm:$0xff]
    %v149 = vld [vmem:[%s4] sm:$0x1]
    %v151 = vlaneseq
    %v152 = vshrl.u32 %v151, 7
    %v153 = vsub.s32 0, %v152
    %v154 = vrot.slane %v149, %v153
    %vm156 = vcmask 261120
    %v158 = vsel %vm156, %v144, 0
    %160 = vmatprep.subr.mxu0 0.0
    %161 = vmatpush1.msra.mxu0 %v145
    %162 = vmatprep.subr.mxu0 0.0
    %163 = vmatpush1.msra.mxu0 %v146
    %164 = vmatprep.subr.mxu0 0.0
    %165 = vmatpush1.msra.mxu0 %v147
    %166 = vmatprep.subr.mxu0 0.0
    %167 = vmatpush1.msra.mxu0 %v148
    %168 = vmatprep.subr.mxu0 0.0
    %169 = vmatpush1.msra.mxu0 0.0
    %170 = vmatprep.subr.mxu0 0.0
    %171 = vmatpush1.msra.mxu0 0.0
    %172 = vmatprep.subr.mxu0 0.0
    %173 = vmatpush1.msra.mxu0 0.0
    %174 = vmatprep.subr.mxu0 0.0
    %175 = vmatpush1.msra.mxu0 0.0
    %176 = vmatprep.subr.mxu0 0.0
    %177 = vmatpush1.msra.mxu0 0.0
    %178 = vmatprep.subr.mxu0 0.0
    %179 = vmatpush1.msra.mxu0 0.0
    %180 = vmatprep.subr.mxu0 0.0
    %181 = vmatpush1.msra.mxu0 0.0
    %182 = vmatprep.subr.mxu0 0.0
    %183 = vmatpush1.msra.mxu0 0.0
    %184 = vmatprep.subr.mxu0 0.0
    %185 = vmatpush1.msra.mxu0 0.0
    %186 = vmatprep.subr.mxu0 0.0
    %187 = vmatpush1.msra.mxu0 0.0
    %188 = vmatprep.subr.mxu0 0.0
    %189 = vmatpush1.msra.mxu0 0.0
    %190 = vmatprep.subr.mxu0 0.0
    %191 = vmatpush1.msra.mxu0 0.0
    %192 = vmatprep.subr.mxu0 0.0
    %193 = vmatpush1.msra.mxu0 0.0
    %194 = vmatprep.subr.mxu0 0.0
    %195 = vmatpush1.msra.mxu0 0.0
    %196 = vmatprep.subr.mxu0 0.0
    %197 = vmatpush1.msra.mxu0 0.0
    %198 = vmatprep.subr.mxu0 0.0
    %199 = vmatpush1.msra.mxu0 0.0
    %200 = vmatprep.subr.mxu0 0.0
    %201 = vmatpush1.msra.mxu0 0.0
    %202 = vmatprep.subr.mxu0 0.0
    %203 = vmatpush1.msra.mxu0 0.0
    %204 = vmatprep.subr.mxu0 0.0
    %205 = vmatpush1.msra.mxu0 0.0
    %206 = vmatprep.subr.mxu0 0.0
    %207 = vmatpush1.msra.mxu0 0.0
    %208 = vmatprep.subr.mxu0 0.0
    %209 = vmatpush1.msra.mxu0 0.0
    %210 = vmatprep.subr.mxu0 0.0
    %211 = vmatpush1.msra.mxu0 0.0
    %212 = vmatprep.subr.mxu0 0.0
    %213 = vmatpush1.msra.mxu0 0.0
    %214 = vmatprep.subr.mxu0 0.0
    %215 = vmatpush1.msra.mxu0 0.0
    %216 = vmatprep.subr.mxu0 0.0
    %217 = vmatpush1.msra.mxu0 0.0
    %218 = vmatprep.subr.mxu0 0.0
    %219 = vmatpush1.msra.mxu0 0.0
    %220 = vmatprep.subr.mxu0 0.0
    %221 = vmatpush1.msra.mxu0 0.0
    %222 = vmatprep.subr.mxu0 0.0
    %223 = vmatpush1.msra.mxu0 0.0
    %224 = vmatprep.mubr.f32.mxu0 0.0
    %225 = vmatmul.mubr.f32.gmra.mrb[0].mxu0 %v158
    %v226 = vpop.f32.mrb[0].mxu0
    %v227 = vadd.f32 %v154, %v226
    %v228 = vpop.f32.mrb[0].mxu0
    %229 = vdwg.mxu0
    %v230 = vxor.u32 %v227, 2147483648
    %v231 = vmul.f32 %v230, 1.442695
    %v232 = vpow.pop %v231
    %v233 = vadd.f32 %v232, 1.0
    %v234 = vrcp.pop %v233
    %v235 = vmul.f32 1.0, %v234
    %vm236 = vcmask 523264
    %237 = vst.msk [vmem:[#allocation8] sm:$0xff] %vm236, %v235
    // Predicated region
    $region34: #{_decoder_v2_impl.1} parent=1 // pred_check
      _
    $region35: #{_decoder_v2_impl.1} parent=1 // pred_check_branch
      %239 = sbr.rel (0) target = $region37
    $region36: #{_decoder_v2_impl.1} parent=1 // pred_region
      %s241 = ssub.s32 128, 128
      %242 = vsyncadd [#allocation4], %s241
      %s244 = sshll.u32 [#allocation8], 4
      %s245 = int_to_ptr.vmem [resolvable:$true] %s244
      %247 = dma.vmem_to_hbm [thread:$0]  %s245, 128, %s5, [#allocation4]
    $region37: #{_decoder_v2_impl.1} parent=1 // pred_fallthru
      _
    // Predicated region
    $region38: #{_decoder_v2_impl.1} parent=1 // pred_check
      _
    $region39: #{_decoder_v2_impl.1} parent=1 // pred_check_branch
      %249 = sbr.rel (0) target = $region41
    $region40: #{_decoder_v2_impl.1} parent=1 // pred_region
      %250 = dma.done [#allocation4], 128
    $region41: #{_decoder_v2_impl.1} parent=1 // pred_fallthru
      _
    %251 = vsyncpa [#allocation3], 1
    %252 = vsyncpa [#allocation6], 1
    %253 = vsyncpa [#allocation4], 1

// kernel: _decoder_v2_impl.1
$region0: #{_decoder_v2_impl.1}
  #allocation0 [shape = 'u32[]', space=smem, size = 0x4, offset = 0x4, fixed_abs, tag = 'smem constant byte address 0x4 - core index']
  #allocation1 [shape = 'u32[144,128]{1,0:T(1,128)}', space=vmem, size = 0x12000, scoped, tag = 'internal scratch']
  %s0 = inlined_call_operand.hbm [shape: f32[8,16], index: 0, kind: input, shape index: {}]
  %s1 = inlined_call_operand.hbm [shape: f32[16,32], index: 1, kind: input, shape index: {}]
  %s2 = inlined_call_operand.vmem [shape: f32[1,32], index: 2, kind: input, shape index: {}]
  %s3 = inlined_call_operand.hbm [shape: f32[32,64], index: 3, kind: input, shape index: {}]
  %s4 = inlined_call_operand.vmem [shape: f32[1,64], index: 4, kind: input, shape index: {}]
  %s5 = inlined_call_operand.hbm [shape: f32[8,64], index: 5, kind: output, shape index: {}]
  %s6 = sld [smem:[#allocation0]]
  $region42: #{_decoder_v2_impl.1} parent=0
    _
  %s8 = ssub.s32 1, %s6
  %s9 = scalar_select 0, %s8, %s6
  $region1: #{_decoder_v2_impl.1} parent=0
    #allocation2 [shape = 'u8[4096]{0}', space=vmem, size = 0x1000, scoped, tag = 'input window, operand 0, single buffered']
    #allocation3 [shape = 's32[1]{0}', space=sflag, size = 0x4, scoped, tag = 'scoped memory for _decoder_v2_impl.1']
    #allocation4 [shape = 's32[1]{0}', space=sflag, size = 0x4, scoped, tag = 'scoped memory for _decoder_v2_impl.1']
    #allocation5 [shape = 'u8[8192]{0}', space=vmem, size = 0x2000, scoped, tag = 'input window, operand 1, single buffered']
    #allocation6 [shape = 's32[1]{0}', space=sflag, size = 0x4, scoped, tag = 'scoped memory for _decoder_v2_impl.1']
    #allocation7 [shape = 'u8[16384]{0}', space=vmem, size = 0x4000, scoped, tag = 'input window, operand 3, single buffered']
    #allocation8 [shape = 'u8[4096]{0}', space=vmem, size = 0x1000, scoped, tag = 'output window, operand 0, single buffered']
    %10 = vsyncpa [#allocation3], 0
    %11 = vsyncpa [#allocation6], 0
    %12 = vsyncpa [#allocation4], 0
    // Predicated region
    $region2: #{_decoder_v2_impl.1} parent=1 // pred_check
      _
    $region3: #{_decoder_v2_impl.1} parent=1 // pred_check_branch
      %14 = sbr.rel (0) target = $region5
    $region4: #{_decoder_v2_impl.1} parent=1 // pred_region
      %s16 = ssub.s32 128, 128
      %17 = vsyncadd [#allocation3], %s16
      %s19 = sshll.u32 [#allocation2], 4
      %s20 = int_to_ptr.vmem [resolvable:$true] %s19
      %22 = dma.hbm_to_vmem [thread:$0]  %s0, 128, %s20, [#allocation3]
    $region5: #{_decoder_v2_impl.1} parent=1 // pred_fallthru
      _
    // Predicated region
    $region6: #{_decoder_v2_impl.1} parent=1 // pred_check
      _
    $region7: #{_decoder_v2_impl.1} parent=1 // pred_check_branch
      %24 = sbr.rel (0) target = $region9
    $region8: #{_decoder_v2_impl.1} parent=1 // pred_region
      %s26 = ssub.s32 256, 256
      %27 = vsyncadd [#allocation6], %s26
      %s28 = sshll.u32 [#allocation5], 4
      %s29 = int_to_ptr.vmem [resolvable:$true] %s28
      %34 = dma.hbm_to_vmem [thread:$0]  %s1, 256, %s29, [#allocation6], 128, 128, 8
    $region9: #{_decoder_v2_impl.1} parent=1 // pred_fallthru
      _
    // Predicated region
    $region10: #{_decoder_v2_impl.1} parent=1 // pred_check
      _
    $region11: #{_decoder_v2_impl.1} parent=1 // pred_check_branch
      %36 = sbr.rel (0) target = $region13
    $region12: #{_decoder_v2_impl.1} parent=1 // pred_region
      _
    $region13: #{_decoder_v2_impl.1} parent=1 // pred_fallthru
      _
    // Predicated region
    $region14: #{_decoder_v2_impl.1} parent=1 // pred_check
      _
    $region15: #{_decoder_v2_impl.1} parent=1 // pred_check_branch
      %38 = sbr.rel (0) target = $region17
    $region16: #{_decoder_v2_impl.1} parent=1 // pred_region
      %s40 = ssub.s32 512, 512
      %41 = vsyncadd [#allocation6], %s40
      %s42 = sshll.u32 [#allocation7], 4
      %s43 = int_to_ptr.vmem [resolvable:$true] %s42
      %48 = dma.hbm_to_vmem [thread:$0]  %s3, 512, %s43, [#allocation6], 128, 128, 8
    $region17: #{_decoder_v2_impl.1} parent=1 // pred_fallthru
      _
    // Predicated region
    $region18: #{_decoder_v2_impl.1} parent=1 // pred_check
      _
    $region19: #{_decoder_v2_impl.1} parent=1 // pred_check_branch
      %50 = sbr.rel (0) target = $region21
    $region20: #{_decoder_v2_impl.1} parent=1 // pred_region
      _
    $region21: #{_decoder_v2_impl.1} parent=1 // pred_fallthru
      _
    // Predicated region
    $region22: #{_decoder_v2_impl.1} parent=1 // pred_check
      _
    $region23: #{_decoder_v2_impl.1} parent=1 // pred_check_branch
      %52 = sbr.rel (0) target = $region25
    $region24: #{_decoder_v2_impl.1} parent=1 // pred_region
      %53 = dma.done [#allocation3], 128
    $region25: #{_decoder_v2_impl.1} parent=1 // pred_fallthru
      _
    // Predicated region
    $region26: #{_decoder_v2_impl.1} parent=1 // pred_check
      _
    $region27: #{_decoder_v2_impl.1} parent=1 // pred_check_branch
      %55 = sbr.rel (0) target = $region29
    $region28: #{_decoder_v2_impl.1} parent=1 // pred_region
      %56 = dma.done [#allocation6], 256
    $region29: #{_decoder_v2_impl.1} parent=1 // pred_fallthru
      _
    // Predicated region
    $region30: #{_decoder_v2_impl.1} parent=1 // pred_check
      _
    $region31: #{_decoder_v2_impl.1} parent=1 // pred_check_branch
      %58 = sbr.rel (0) target = $region33
    $region32: #{_decoder_v2_impl.1} parent=1 // pred_region
      %59 = dma.done [#allocation6], 512
    $region33: #{_decoder_v2_impl.1} parent=1 // pred_fallthru
      _
    %v60 = vld [vmem:[#allocation2] sm:$0xff]
    %v61 = vld [vmem:[#allocation5] sm:$0xff]
    %v62 = vld [vmem:[#allocation5 + $0x8] sm:$0xff]
    %v63 = vld [vmem:[%s2] sm:$0x1]
    %v65 = vlaneseq
    %v66 = vshrl.u32 %v65, 7
    %v67 = vsub.s32 0, %v66
    %v68 = vrot.slane %v63, %v67
    %vm70 = vcmask 130048
    %v72 = vsel %vm70, %v60, 0
    %74 = vmatprep.subr.mxu0 0.0
    %75 = vmatpush1.msra.mxu0 %v61
    %76 = vmatprep.subr.mxu0 0.0
    %77 = vmatpush1.msra.mxu0 %v62
    %78 = vmatprep.subr.mxu0 0.0
    %79 = vmatpush1.msra.mxu0 0.0
    %80 = vmatprep.subr.mxu0 0.0
    %81 = vmatpush1.msra.mxu0 0.0
    %82 = vmatprep.subr.mxu0 0.0
    %83 = vmatpush1.msra.mxu0 0.0
    %84 = vmatprep.subr.mxu0 0.0
    %85 = vmatpush1.msra.mxu0 0.0
    %86 = vmatprep.subr.mxu0 0.0
    %87 = vmatpush1.msra.mxu0 0.0
    %88 = vmatprep.subr.mxu0 0.0
    %89 = vmatpush1.msra.mxu0 0.0
    %90 = vmatprep.subr.mxu0 0.0
    %91 = vmatpush1.msra.mxu0 0.0
    %92 = vmatprep.subr.mxu0 0.0
    %93 = vmatpush1.msra.mxu0 0.0
    %94 = vmatprep.subr.mxu0 0.0
    %95 = vmatpush1.msra.mxu0 0.0
    %96 = vmatprep.subr.mxu0 0.0
    %97 = vmatpush1.msra.mxu0 0.0
    %98 = vmatprep.subr.mxu0 0.0
    %99 = vmatpush1.msra.mxu0 0.0
    %100 = vmatprep.subr.mxu0 0.0
    %101 = vmatpush1.msra.mxu0 0.0
    %102 = vmatprep.subr.mxu0 0.0
    %103 = vmatpush1.msra.mxu0 0.0
    %104 = vmatprep.subr.mxu0 0.0
    %105 = vmatpush1.msra.mxu0 0.0
    %106 = vmatprep.subr.mxu0 0.0
    %107 = vmatpush1.msra.mxu0 0.0
    %108 = vmatprep.subr.mxu0 0.0
    %109 = vmatpush1.msra.mxu0 0.0
    %110 = vmatprep.subr.mxu0 0.0
    %111 = vmatpush1.msra.mxu0 0.0
    %112 = vmatprep.subr.mxu0 0.0
    %113 = vmatpush1.msra.mxu0 0.0
    %114 = vmatprep.subr.mxu0 0.0
    %115 = vmatpush1.msra.mxu0 0.0
    %116 = vmatprep.subr.mxu0 0.0
    %117 = vmatpush1.msra.mxu0 0.0
    %118 = vmatprep.subr.mxu0 0.0
    %119 = vmatpush1.msra.mxu0 0.0
    %120 = vmatprep.subr.mxu0 0.0
    %121 = vmatpush1.msra.mxu0 0.0
    %122 = vmatprep.subr.mxu0 0.0
    %123 = vmatpush1.msra.mxu0 0.0
    %124 = vmatprep.subr.mxu0 0.0
    %125 = vmatpush1.msra.mxu0 0.0
    %126 = vmatprep.subr.mxu0 0.0
    %127 = vmatpush1.msra.mxu0 0.0
    %128 = vmatprep.subr.mxu0 0.0
    %129 = vmatpush1.msra.mxu0 0.0
    %130 = vmatprep.subr.mxu0 0.0
    %131 = vmatpush1.msra.mxu0 0.0
    %132 = vmatprep.subr.mxu0 0.0
    %133 = vmatpush1.msra.mxu0 0.0
    %134 = vmatprep.subr.mxu0 0.0
    %135 = vmatpush1.msra.mxu0 0.0
    %136 = vmatprep.subr.mxu0 0.0
    %137 = vmatpush1.msra.mxu0 0.0
    %138 = vmatprep.mubr.f32.mxu0 0.0
    %139 = vmatmul.mubr.f32.gmra.mrb[0].mxu0 %v72
    %v140 = vpop.f32.mrb[0].mxu0
    %v141 = vadd.f32 %v68, %v140
    %v142 = vpop.f32.mrb[0].mxu0
    %143 = vdwg.mxu0
    %v144 = vmax.f32 %v141, 0.0
    %v145 = vld [vmem:[#allocation7] sm:$0xff]
    %v146 = vld [vmem:[#allocation7 + $0x8] sm:$0xff]
    %v147 = vld [vmem:[#allocation7 + $0x10] sm:$0xff]
    %v148 = vld [vmem:[#allocation7 + $0x18] sm:$0xff]
    %v149 = vld [vmem:[%s4] sm:$0x1]
    %v151 = vlaneseq
    %v152 = vshrl.u32 %v151, 7
    %v153 = vsub.s32 0, %v152
    %v154 = vrot.slane %v149, %v153
    %vm156 = vcmask 261120
    %v158 = vsel %vm156, %v144, 0
    %160 = vmatprep.subr.mxu0 0.0
    %161 = vmatpush1.msra.mxu0 %v145
    %162 = vmatprep.subr.mxu0 0.0
    %163 = vmatpush1.msra.mxu0 %v146
    %164 = vmatprep.subr.mxu0 0.0
    %165 = vmatpush1.msra.mxu0 %v147
    %166 = vmatprep.subr.mxu0 0.0
    %167 = vmatpush1.msra.mxu0 %v148
    %168 = vmatprep.subr.mxu0 0.0
    %169 = vmatpush1.msra.mxu0 0.0
    %170 = vmatprep.subr.mxu0 0.0
    %171 = vmatpush1.msra.mxu0 0.0
    %172 = vmatprep.subr.mxu0 0.0
    %173 = vmatpush1.msra.mxu0 0.0
    %174 = vmatprep.subr.mxu0 0.0
    %175 = vmatpush1.msra.mxu0 0.0
    %176 = vmatprep.subr.mxu0 0.0
    %177 = vmatpush1.msra.mxu0 0.0
    %178 = vmatprep.subr.mxu0 0.0
    %179 = vmatpush1.msra.mxu0 0.0
    %180 = vmatprep.subr.mxu0 0.0
    %181 = vmatpush1.msra.mxu0 0.0
    %182 = vmatprep.subr.mxu0 0.0
    %183 = vmatpush1.msra.mxu0 0.0
    %184 = vmatprep.subr.mxu0 0.0
    %185 = vmatpush1.msra.mxu0 0.0
    %186 = vmatprep.subr.mxu0 0.0
    %187 = vmatpush1.msra.mxu0 0.0
    %188 = vmatprep.subr.mxu0 0.0
    %189 = vmatpush1.msra.mxu0 0.0
    %190 = vmatprep.subr.mxu0 0.0
    %191 = vmatpush1.msra.mxu0 0.0
    %192 = vmatprep.subr.mxu0 0.0
    %193 = vmatpush1.msra.mxu0 0.0
    %194 = vmatprep.subr.mxu0 0.0
    %195 = vmatpush1.msra.mxu0 0.0
    %196 = vmatprep.subr.mxu0 0.0
    %197 = vmatpush1.msra.mxu0 0.0
    %198 = vmatprep.subr.mxu0 0.0
    %199 = vmatpush1.msra.mxu0 0.0
    %200 = vmatprep.subr.mxu0 0.0
    %201 = vmatpush1.msra.mxu0 0.0
    %202 = vmatprep.subr.mxu0 0.0
    %203 = vmatpush1.msra.mxu0 0.0
    %204 = vmatprep.subr.mxu0 0.0
    %205 = vmatpush1.msra.mxu0 0.0
    %206 = vmatprep.subr.mxu0 0.0
    %207 = vmatpush1.msra.mxu0 0.0
    %208 = vmatprep.subr.mxu0 0.0
    %209 = vmatpush1.msra.mxu0 0.0
    %210 = vmatprep.subr.mxu0 0.0
    %211 = vmatpush1.msra.mxu0 0.0
    %212 = vmatprep.subr.mxu0 0.0
    %213 = vmatpush1.msra.mxu0 0.0
    %214 = vmatprep.subr.mxu0 0.0
    %215 = vmatpush1.msra.mxu0 0.0
    %216 = vmatprep.subr.mxu0 0.0
    %217 = vmatpush1.msra.mxu0 0.0
    %218 = vmatprep.subr.mxu0 0.0
    %219 = vmatpush1.msra.mxu0 0.0
    %220 = vmatprep.subr.mxu0 0.0
    %221 = vmatpush1.msra.mxu0 0.0
    %222 = vmatprep.subr.mxu0 0.0
    %223 = vmatpush1.msra.mxu0 0.0
    %224 = vmatprep.mubr.f32.mxu0 0.0
    %225 = vmatmul.mubr.f32.gmra.mrb[0].mxu0 %v158
    %v226 = vpop.f32.mrb[0].mxu0
    %v227 = vadd.f32 %v154, %v226
    %v228 = vpop.f32.mrb[0].mxu0
    %229 = vdwg.mxu0
    %v230 = vxor.u32 %v227, 2147483648
    %v231 = vmul.f32 %v230, 1.442695
    %v232 = vpow.pop %v231
    %v233 = vadd.f32 %v232, 1.0
    %v234 = vrcp.pop %v233
    %v235 = vmul.f32 1.0, %v234
    %vm236 = vcmask 523264
    %237 = vst.msk [vmem:[#allocation8] sm:$0xff] %vm236, %v235
    // Predicated region
    $region34: #{_decoder_v2_impl.1} parent=1 // pred_check
      _
    $region35: #{_decoder_v2_impl.1} parent=1 // pred_check_branch
      %239 = sbr.rel (0) target = $region37
    $region36: #{_decoder_v2_impl.1} parent=1 // pred_region
      %s241 = ssub.s32 128, 128
      %242 = vsyncadd [#allocation4], %s241
      %s244 = sshll.u32 [#allocation8], 4
      %s245 = int_to_ptr.vmem [resolvable:$true] %s244
      %247 = dma.vmem_to_hbm [thread:$0]  %s245, 128, %s5, [#allocation4]
    $region37: #{_decoder_v2_impl.1} parent=1 // pred_fallthru
      _
    // Predicated region
    $region38: #{_decoder_v2_impl.1} parent=1 // pred_check
      _
    $region39: #{_decoder_v2_impl.1} parent=1 // pred_check_branch
      %249 = sbr.rel (0) target = $region41
    $region40: #{_decoder_v2_impl.1} parent=1 // pred_region
      %250 = dma.done [#allocation4], 128
    $region41: #{_decoder_v2_impl.1} parent=1 // pred_fallthru
      _
    %251 = vsyncpa [#allocation3], 1
    %252 = vsyncpa [#allocation6], 1
    %253 = vsyncpa [#allocation4], 1

</llo_original>
